<compile_context>
chip_gen: v5e
topology: v5e:2x2
jax: 0.10.0
libtpu: 0.0.40
codegen_flags: <defaults>
</compile_context>

<pallas_src>
import jax
import jax.numpy as jnp
from jax.experimental import pallas as pl
from jax.experimental.pallas import tpu as pltpu

_TILE_BYTES = 4 * 1024 * 1024     # per-tile VMEM budget (~16 MiB with 4x buffering)
_VMEM_LIMIT = 32 * 1024 * 1024    # explicit scoped-VMEM cap: safe on v5e/v6e/v7x


def _copy_kernel(x_ref, o_ref):
    # Identity forward: pure VMEM tile copy.
    o_ref[...] = x_ref[...]


def _sublane_multiple(dtype):
    # Native sublane packing: f32 -> 8, bf16/f16 -> 16, int8/fp8 -> 32.
    return {4: 8, 2: 16, 1: 32}.get(jnp.dtype(dtype).itemsize, 8)


def lightgcn_conv(x, edge_index=None):
    """Identity forward of LightGCNConv (no-op stub) as a Pallas kernel.

    x: [N, D] node-embedding matrix. Returns an array equal to x.
    edge_index: accepted for API parity with the PyTorch module, unused.
    """
    # TODO(synk): the reference module is a pass-through stub; a real LightGCN
    # propagation (D^-1/2 A D^-1/2 x over edge_index) is intentionally not done.
    N, D = x.shape
    itemsize = jnp.dtype(x.dtype).itemsize
    sub = _sublane_multiple(x.dtype)
    row_bytes = D * itemsize

    if N * row_bytes <= _TILE_BYTES or N <= sub:
        # Whole array in one full-extent block: exempt from the (8,128) rule,
        # no padding needed, single DMA in / single DMA out.
        tile_n = N
    else:
        # Largest row-block (multiple of the native sublane count) that fits the
        # per-tile budget; lane dim is always the full D (lane-dense stores).
        max_rows = max(sub, _TILE_BYTES // row_bytes)
        tile_n = min(N, max(sub, (max_rows // sub) * sub))

    grid = (pl.cdiv(N, tile_n),)

    out = pl.pallas_call(
        _copy_kernel,
        out_shape=jax.ShapeDtypeStruct((N, D), x.dtype),
        grid_spec=pltpu.PrefetchScalarGridSpec(
            num_scalar_prefetch=0,
            grid=grid,
            in_specs=[pl.BlockSpec((tile_n, D), lambda i: (i, 0))],
            out_specs=pl.BlockSpec((tile_n, D), lambda i: (i, 0)),
        ),
        input_output_aliases={0: 0},
        compiler_params=pltpu.CompilerParams(
            dimension_semantics=("parallel",),
            vmem_limit_bytes=_VMEM_LIMIT,
        ),
    )(x)
    return out


if __name__ == "__main__":
    key = jax.random.PRNGKey(0)
    # Small LightGCN-like shapes: 16 nodes, hidden=32 embedding dim.
    N, D = 16, 32
    x = jax.random.normal(key, (N, D), dtype=jnp.float32)
    # Dummy edge_index (unused by the no-op stub), int32 [2, E].
    edge_index = jnp.zeros((2, 8), dtype=jnp.int32)

    y = lightgcn_conv(x, edge_index)
    y = jax.block_until_ready(y)

    assert y.shape == x.shape and y.dtype == x.dtype
    assert bool(jnp.all(y == x))
    print("KERNEL_OK")
</pallas_src>

<mosaic_0001>
module attributes {stable_mosaic.version = 11 : i64} {
  func.func @_copy_kernel(%arg0: i32, %arg1: memref<16x32xf32, #tpu.memory_space<vmem>>, %arg2: memref<16x32xf32, #tpu.memory_space<vmem>>) attributes {dimension_semantics = [#tpu.dimension_semantics<parallel>], iteration_bounds = array<i64: 1>, scalar_prefetch = 0 : i64, scratch_operands = 0 : i64, tpu.core_type = #tpu.core_type<tc>, window_params = [{transform_indices = @transform_0, window_bounds = array<i64: 16, 32>}, {transform_indices = @transform_1, window_bounds = array<i64: 16, 32>}]} {
    %c0 = arith.constant 0 : index
    %c0_0 = arith.constant 0 : index
    %0 = vector.load %arg1[%c0, %c0_0] : memref<16x32xf32, #tpu.memory_space<vmem>>, vector<16x32xf32>
    %c0_1 = arith.constant 0 : index
    %c0_2 = arith.constant 0 : index
    %1 = vector.load %arg2[%c0_1, %c0_2] : memref<16x32xf32, #tpu.memory_space<vmem>>, vector<16x32xf32>
    tpu.vector_store %arg2[%c0_1, %c0_2], %0 {strides = array<i32>} : memref<16x32xf32, #tpu.memory_space<vmem>>, vector<16x32xf32>,
    return
  }
  func.func @transform_0(%arg0: i32) -> (i32, i32) {
    %c0_i32 = arith.constant 0 : i32
    %c0_i32_0 = arith.constant 0 : i32
    return %arg0, %c0_i32 : i32, i32
  }
  func.func @transform_1(%arg0: i32) -> (i32, i32) {
    %c0_i32 = arith.constant 0 : i32
    %c0_i32_0 = arith.constant 0 : i32
    return %arg0, %c0_i32 : i32, i32
  }
}

</mosaic_0001>

<llo_original>
// kernel: tpu_custom_call.1
$region0: #{tpu_custom_call.1}
  #allocation0 [shape = 'u32[]', space=smem, size = 0x4, offset = 0x4, fixed_abs, tag = 'smem constant byte address 0x4 - core index']
  #allocation1 [shape = 'u32[72,128]{1,0:T(1,128)}', space=vmem, size = 0x9000, scoped, tag = 'internal scratch']
  %s0 = inlined_call_operand.hbm [shape: f32[16,32], index: 0, kind: input, shape index: {}, may-alias: {0,1}]
  %s1 = inlined_call_operand.hbm [shape: f32[16,32], index: 1, kind: output, shape index: {}, may-alias: {0,1}]
  %s2 = sld [smem:[#allocation0]]
  $region18: #{tpu_custom_call.1} parent=0
    _
  %s4 = ssub.s32 1, %s2
  %s5 = scalar_select 0, %s4, %s2
  $region1: #{tpu_custom_call.1} parent=0
    #allocation2 [shape = 'u8[8192]{0}', space=vmem, size = 0x2000, scoped, tag = 'input window, operand 0, single buffered']
    #allocation3 [shape = 's32[1]{0}', space=sflag, size = 0x4, scoped, tag = 'scoped memory for tpu_custom_call.1']
    #allocation4 [shape = 's32[1]{0}', space=sflag, size = 0x4, scoped, tag = 'scoped memory for tpu_custom_call.1']
    #allocation5 [shape = 'u8[8192]{0}', space=vmem, size = 0x2000, scoped, tag = 'output window, operand 0, single buffered']
    %6 = vsyncpa [#allocation3], 0
    %7 = vsyncpa [#allocation4], 0
    // Predicated region
    $region2: #{tpu_custom_call.1} parent=1 // pred_check
      _
    $region3: #{tpu_custom_call.1} parent=1 // pred_check_branch
      %9 = sbr.rel (0) target = $region5
    $region4: #{tpu_custom_call.1} parent=1 // pred_region
      %11 = vsyncadd [#allocation3], 0
      %s12 = sshll.u32 %s0, 4
      %s13 = int_to_ptr.hbm [resolvable:$true] %s12
      %s14 = sshll.u32 [#allocation2], 4
      %s15 = int_to_ptr.vmem [resolvable:$true] %s14
      %20 = dma.hbm_to_vmem [thread:$0]  %s13, 256, %s15, [#allocation3], 128, 128, 8
    $region5: #{tpu_custom_call.1} parent=1 // pred_fallthru
      _
    // Predicated region
    $region6: #{tpu_custom_call.1} parent=1 // pred_check
      _
    $region7: #{tpu_custom_call.1} parent=1 // pred_check_branch
      %22 = sbr.rel (0) target = $region9
    $region8: #{tpu_custom_call.1} parent=1 // pred_region
      %24 = dma.done [#allocation3], 256
    $region9: #{tpu_custom_call.1} parent=1 // pred_fallthru
      _
    %v25 = vld [vmem:[#allocation2] sm:$0xff]
    %v26 = vld [vmem:[#allocation2 + $0x8] sm:$0xff]
    %vm27 = vcmask 261120
    %28 = vst.msk [vmem:[#allocation5] sm:$0xff] %vm27, %v25
    %29 = vst.msk [vmem:[#allocation5 + $0x8] sm:$0xff] %vm27, %v26
    // Predicated region
    $region10: #{tpu_custom_call.1} parent=1 // pred_check
      _
    $region11: #{tpu_custom_call.1} parent=1 // pred_check_branch
      %31 = sbr.rel (0) target = $region13
    $region12: #{tpu_custom_call.1} parent=1 // pred_region
      %33 = vsyncadd [#allocation4], 0
      %s34 = sshll.u32 [#allocation5], 4
      %s35 = int_to_ptr.vmem [resolvable:$true] %s34
      %s36 = sshll.u32 %s1, 4
      %s37 = int_to_ptr.hbm [resolvable:$true] %s36
      %42 = dma.vmem_to_hbm [thread:$0]  %s35, 256, %s37, [#allocation4], 128, 128, 8
    $region13: #{tpu_custom_call.1} parent=1 // pred_fallthru
      _
    // Predicated region
    $region14: #{tpu_custom_call.1} parent=1 // pred_check
      _
    $region15: #{tpu_custom_call.1} parent=1 // pred_check_branch
      %44 = sbr.rel (0) target = $region17
    $region16: #{tpu_custom_call.1} parent=1 // pred_region
      %46 = dma.done [#allocation4], 256
    $region17: #{tpu_custom_call.1} parent=1 // pred_fallthru
      _
    %47 = vsyncpa [#allocation3], 1
    %48 = vsyncpa [#allocation4], 1

</llo_original>
